<compile_context>
chip_gen: v6e
topology: v6e:2x2x1
jax: 0.10.0
libtpu: 0.0.40
codegen_flags: <defaults>
</compile_context>

<pallas_src>
import jax
import jax.numpy as jnp
from jax.experimental import pallas as pl
from jax.experimental.pallas import tpu as pltpu


def tn_decoder_kernel(r_ref, e1_ref, e2_ref, c0_ref, c1e_ref, c2e_ref, q_ref,
                      o_ref):
    # Batched operands: bf16 preferred end-to-end; the cast below is a no-op
    # when they already arrive as bf16 (and a cheap VPU pack otherwise).
    r = r_ref[...].astype(jnp.bfloat16)      # (tb, D0)
    e1 = e1_ref[...].astype(jnp.bfloat16)    # (tb, D1)
    e2 = e2_ref[...].astype(jnp.bfloat16)    # (tb, D2)

    # Lane-dense MXU matmuls: fold each embedding through its (expanded) core.
    u = jnp.dot(r, c0_ref[...], preferred_element_type=jnp.float32)     # (tb, N)
    v1 = jnp.dot(e1, c1e_ref[...], preferred_element_type=jnp.float32)  # (tb, N)
    v2 = jnp.dot(e2, c2e_ref[...], preferred_element_type=jnp.float32)  # (tb, N)

    # Single full-vreg elementwise product.
    prod = (u * v1 * v2).astype(jnp.bfloat16)                           # (tb, N)

    # Final matmul against tiled core3^T; unpadded (tb, D3) f32 output block.
    o_ref[...] = jnp.dot(prod, q_ref[...],
                         preferred_element_type=jnp.float32)            # (tb, D3)


def _choose_batch_tile(B: int) -> int:
    """Pick the batch tile: big tiles to amortize per-grid-step overhead, but
    >= 2 grid steps for large B so the parallel axis shards over v7x's 2 TCs."""
    if B <= 256:
        return B  # whole (small) batch in one grid step
    # Prefer the largest multiple of 256 that divides B and leaves >= 2 steps.
    for cand in range(2048, 255, -256):
        if B % cand == 0 and B // cand >= 2:
            return cand
    # Fallback: any multiple of 8 dividing B with >= 2 steps.
    for cand in range(min(2048, B // 2) // 8 * 8, 7, -8):
        if B % cand == 0:
            return cand
    return B


def tn_decoder(r_embed, ent1, ent2, core0, core1, core2, core3, *, tb=None):
    """Pallas wrapper. Host-side glue: expand cores into lane-dense matrices."""
    B, D0 = r_embed.shape
    D1, R1 = core1.shape
    D2, R2 = core2.shape
    D3, R3 = core3.shape
    assert core0.shape == (D0, R1, R2, R3)

    if tb is None:
        tb = _choose_batch_tile(B)
    assert B % tb == 0 and (tb % 8 == 0 or tb == B)

    N = R1 * R2 * R3

    # Host-side expansion so every in-kernel contraction is a lane-dense matmul.
    c0_flat = core0.reshape(D0, N).astype(jnp.bfloat16)                          # (D0, N)
    c1e = jnp.repeat(core1, R2 * R3, axis=1).astype(jnp.bfloat16)                # (D1, N)
    c2e = jnp.tile(jnp.repeat(core2, R3, axis=1), (1, R1)).astype(jnp.bfloat16)  # (D2, N)
    q = jnp.tile(core3.T, (R1 * R2, 1)).astype(jnp.bfloat16)                     # (N, D3)

    # NOTE: the four constant operands could be single-buffered
    # (pipeline_mode=pl.Buffered(1)) if N or D3 ever grow enough for the
    # useless double buffers to matter on v7x's 64 MiB VMEM; at these sizes
    # (~160 KB total) it is irrelevant.
    out = pl.pallas_call(
        tn_decoder_kernel,
        out_shape=jax.ShapeDtypeStruct((B, D3), jnp.float32),
        grid=(B // tb,),
        in_specs=[
            pl.BlockSpec((tb, D0), lambda i: (i, 0)),    # r_embed tile
            pl.BlockSpec((tb, D1), lambda i: (i, 0)),    # ent1 tile
            pl.BlockSpec((tb, D2), lambda i: (i, 0)),    # ent2 tile
            pl.BlockSpec((D0, N), lambda i: (0, 0)),     # core0 flat (full, resident)
            pl.BlockSpec((D1, N), lambda i: (0, 0)),     # core1 expanded (full, resident)
            pl.BlockSpec((D2, N), lambda i: (0, 0)),     # core2 expanded (full, resident)
            pl.BlockSpec((N, D3), lambda i: (0, 0)),     # core3^T tiled (full, resident)
        ],
        out_specs=pl.BlockSpec((tb, D3), lambda i: (i, 0)),
        compiler_params=pltpu.CompilerParams(
            dimension_semantics=("parallel",)),
    )(r_embed, ent1, ent2, c0_flat, c1e, c2e, q)

    return out


if __name__ == "__main__":
    # Graph / dims / ranks mirroring TensorNetworkDecoder.__init__ for the
    # 4-node star graph (nodes {0,1,2,3}, edges (0,1),(0,2),(0,3), miss = 3).
    dims = {0: 16, 1: 32, 2: 32, 3: 32}
    ranks = {(0, 1): 8, (0, 2): 8, (0, 3): 8}
    B = 16
    miss = 3

    key = jax.random.PRNGKey(0)
    kc0, kc1, kc2, kc3, kr, k1, k2 = jax.random.split(key, 7)

    # torch.randn(*shape) * 0.001 analogue (cores kept in f32 as parameters).
    core0 = jax.random.normal(
        kc0, (dims[0], ranks[(0, 1)], ranks[(0, 2)], ranks[(0, 3)]),
        jnp.float32) * 0.001
    core1 = jax.random.normal(kc1, (dims[1], ranks[(0, 1)]), jnp.float32) * 0.001
    core2 = jax.random.normal(kc2, (dims[2], ranks[(0, 2)]), jnp.float32) * 0.001
    core3 = jax.random.normal(kc3, (dims[3], ranks[(0, 3)]), jnp.float32) * 0.001

    # Forward inputs: relation embedding for node 0, entity embeddings for
    # nodes 1 and 2.  Upstream produces them in bf16 (halves the batched-input
    # HBM traffic; the kernel's in-kernel cast becomes a no-op).
    r_embed = jax.random.normal(kr, (B, dims[0]), jnp.float32).astype(jnp.bfloat16)
    ent1 = jax.random.normal(k1, (B, dims[1]), jnp.float32).astype(jnp.bfloat16)
    ent2 = jax.random.normal(k2, (B, dims[2]), jnp.float32).astype(jnp.bfloat16)

    out = tn_decoder(r_embed, ent1, ent2, core0, core1, core2, core3)
    out = jax.block_until_ready(out)

    # Reference: the exact einsum the PyTorch module builds for miss = 3,
    # evaluated in f32 on the same (bf16) inputs the kernel receives.
    ref = jnp.einsum('aefg,be,cf,dg,Ba,Bb,Bc->Bd',
                     core0, core1, core2, core3,
                     r_embed.astype(jnp.float32),
                     ent1.astype(jnp.float32),
                     ent2.astype(jnp.float32),
                     precision=jax.lax.Precision.HIGHEST)

    assert out.shape == (B, dims[miss]), out.shape
    # bf16 one-pass matmuls: use a relative (scale-normalized) error check.
    rel_err = float(jnp.max(jnp.abs(out - ref)) / jnp.max(jnp.abs(ref)))
    assert rel_err < 5e-2, rel_err
    print("KERNEL_OK")
</pallas_src>

<mosaic_0001>
module attributes {stable_mosaic.version = 11 : i64} {
  func.func @tn_decoder_kernel(%arg0: i32, %arg1: memref<16x16xbf16, #tpu.memory_space<vmem>>, %arg2: memref<16x32xbf16, #tpu.memory_space<vmem>>, %arg3: memref<16x32xbf16, #tpu.memory_space<vmem>>, %arg4: memref<16x512xbf16, #tpu.memory_space<vmem>>, %arg5: memref<32x512xbf16, #tpu.memory_space<vmem>>, %arg6: memref<32x512xbf16, #tpu.memory_space<vmem>>, %arg7: memref<512x32xbf16, #tpu.memory_space<vmem>>, %arg8: memref<16x32xf32, #tpu.memory_space<vmem>>) attributes {dimension_semantics = [#tpu.dimension_semantics<parallel>], iteration_bounds = array<i64: 1>, scalar_prefetch = 0 : i64, scratch_operands = 0 : i64, tpu.core_type = #tpu.core_type<tc>, window_params = [{transform_indices = @transform_0, window_bounds = array<i64: 16, 16>}, {transform_indices = @transform_1, window_bounds = array<i64: 16, 32>}, {transform_indices = @transform_2, window_bounds = array<i64: 16, 32>}, {pipeline_mode = #tpu.pipeline_mode<synchronous>, transform_indices = @transform_3, window_bounds = array<i64: 16, 512>}, {pipeline_mode = #tpu.pipeline_mode<synchronous>, transform_indices = @transform_4, window_bounds = array<i64: 32, 512>}, {pipeline_mode = #tpu.pipeline_mode<synchronous>, transform_indices = @transform_5, window_bounds = array<i64: 32, 512>}, {pipeline_mode = #tpu.pipeline_mode<synchronous>, transform_indices = @transform_6, window_bounds = array<i64: 512, 32>}, {transform_indices = @transform_7, window_bounds = array<i64: 16, 32>}]} {
    %c0 = arith.constant 0 : index
    %c0_0 = arith.constant 0 : index
    %0 = vector.load %arg1[%c0, %c0_0] : memref<16x16xbf16, #tpu.memory_space<vmem>>, vector<16x16xbf16>
    %c0_1 = arith.constant 0 : index
    %c0_2 = arith.constant 0 : index
    %1 = vector.load %arg2[%c0_1, %c0_2] : memref<16x32xbf16, #tpu.memory_space<vmem>>, vector<16x32xbf16>
    %c0_3 = arith.constant 0 : index
    %c0_4 = arith.constant 0 : index
    %2 = vector.load %arg3[%c0_3, %c0_4] : memref<16x32xbf16, #tpu.memory_space<vmem>>, vector<16x32xbf16>
    %c0_5 = arith.constant 0 : index
    %c0_6 = arith.constant 0 : index
    %3 = vector.load %arg4[%c0_5, %c0_6] : memref<16x512xbf16, #tpu.memory_space<vmem>>, vector<16x512xbf16>
    %cst = arith.constant dense<0.000000e+00> : vector<16x512xf32>
    %4 = tpu.matmul %0, %3, %cst {dimension_numbers = #tpu.dot_dimension_numbers<[1], [0], [0], [1], [0, 0, 1, 1], [], []>} : vector<16x16xbf16>, vector<16x512xbf16>, vector<16x512xf32> -> vector<16x512xf32>
    %c0_7 = arith.constant 0 : index
    %c0_8 = arith.constant 0 : index
    %5 = vector.load %arg5[%c0_7, %c0_8] : memref<32x512xbf16, #tpu.memory_space<vmem>>, vector<32x512xbf16>
    %cst_9 = arith.constant dense<0.000000e+00> : vector<16x512xf32>
    %6 = tpu.matmul %1, %5, %cst_9 {dimension_numbers = #tpu.dot_dimension_numbers<[1], [0], [0], [1], [0, 0, 1, 1], [], []>} : vector<16x32xbf16>, vector<32x512xbf16>, vector<16x512xf32> -> vector<16x512xf32>
    %c0_10 = arith.constant 0 : index
    %c0_11 = arith.constant 0 : index
    %7 = vector.load %arg6[%c0_10, %c0_11] : memref<32x512xbf16, #tpu.memory_space<vmem>>, vector<32x512xbf16>
    %cst_12 = arith.constant dense<0.000000e+00> : vector<16x512xf32>
    %8 = tpu.matmul %2, %7, %cst_12 {dimension_numbers = #tpu.dot_dimension_numbers<[1], [0], [0], [1], [0, 0, 1, 1], [], []>} : vector<16x32xbf16>, vector<32x512xbf16>, vector<16x512xf32> -> vector<16x512xf32>
    %9 = arith.mulf %4, %6 : vector<16x512xf32>
    %10 = arith.mulf %9, %8 : vector<16x512xf32>
    %11 = arith.truncf %10 : vector<16x512xf32> to vector<16x512xbf16>
    %c0_13 = arith.constant 0 : index
    %c0_14 = arith.constant 0 : index
    %12 = vector.load %arg7[%c0_13, %c0_14] : memref<512x32xbf16, #tpu.memory_space<vmem>>, vector<512x32xbf16>
    %cst_15 = arith.constant dense<0.000000e+00> : vector<16x32xf32>
    %13 = tpu.matmul %11, %12, %cst_15 {dimension_numbers = #tpu.dot_dimension_numbers<[1], [0], [0], [1], [0, 0, 1, 1], [], []>} : vector<16x512xbf16>, vector<512x32xbf16>, vector<16x32xf32> -> vector<16x32xf32>
    %c0_16 = arith.constant 0 : index
    %c0_17 = arith.constant 0 : index
    %14 = vector.load %arg8[%c0_16, %c0_17] : memref<16x32xf32, #tpu.memory_space<vmem>>, vector<16x32xf32>
    tpu.vector_store %arg8[%c0_16, %c0_17], %13 {strides = array<i32>} : memref<16x32xf32, #tpu.memory_space<vmem>>, vector<16x32xf32>,
    return
  }
  func.func @transform_0(%arg0: i32) -> (i32, i32) {
    %c0_i32 = arith.constant 0 : i32
    %c0_i32_0 = arith.constant 0 : i32
    return %arg0, %c0_i32 : i32, i32
  }
  func.func @transform_1(%arg0: i32) -> (i32, i32) {
    %c0_i32 = arith.constant 0 : i32
    %c0_i32_0 = arith.constant 0 : i32
    return %arg0, %c0_i32 : i32, i32
  }
  func.func @transform_2(%arg0: i32) -> (i32, i32) {
    %c0_i32 = arith.constant 0 : i32
    %c0_i32_0 = arith.constant 0 : i32
    return %arg0, %c0_i32 : i32, i32
  }
  func.func @transform_3(%arg0: i32) -> (i32, i32) {
    %c0_i32 = arith.constant 0 : i32
    %c0_i32_0 = arith.constant 0 : i32
    %c0_i32_1 = arith.constant 0 : i32
    return %c0_i32, %c0_i32_0 : i32, i32
  }
  func.func @transform_4(%arg0: i32) -> (i32, i32) {
    %c0_i32 = arith.constant 0 : i32
    %c0_i32_0 = arith.constant 0 : i32
    %c0_i32_1 = arith.constant 0 : i32
    return %c0_i32, %c0_i32_0 : i32, i32
  }
  func.func @transform_5(%arg0: i32) -> (i32, i32) {
    %c0_i32 = arith.constant 0 : i32
    %c0_i32_0 = arith.constant 0 : i32
    %c0_i32_1 = arith.constant 0 : i32
    return %c0_i32, %c0_i32_0 : i32, i32
  }
  func.func @transform_6(%arg0: i32) -> (i32, i32) {
    %c0_i32 = arith.constant 0 : i32
    %c0_i32_0 = arith.constant 0 : i32
    %c0_i32_1 = arith.constant 0 : i32
    return %c0_i32, %c0_i32_0 : i32, i32
  }
  func.func @transform_7(%arg0: i32) -> (i32, i32) {
    %c0_i32 = arith.constant 0 : i32
    %c0_i32_0 = arith.constant 0 : i32
    return %arg0, %c0_i32 : i32, i32
  }
}

</mosaic_0001>

<llo_original>
// kernel: tpu_custom_call.1
$region0: #{tpu_custom_call.1}
  #allocation0 [shape = 'u32[]', space=smem, size = 0x4, offset = 0x4, fixed_abs, tag = 'smem constant byte address 0x4 - core index']
  #allocation1 [shape = 'u32[144,128]{1,0:T(1,128)}', space=vmem, size = 0x12000, scoped, tag = 'internal scratch']
  %s0 = inlined_call_operand.vmem [shape: bf16[16,16], index: 0, kind: input, shape index: {}]
  %s1 = inlined_call_operand.vmem [shape: bf16[16,32], index: 1, kind: input, shape index: {}]
  %s2 = inlined_call_operand.vmem [shape: bf16[16,32], index: 2, kind: input, shape index: {}]
  %s3 = inlined_call_operand.vmem [shape: bf16[16,512], index: 3, kind: input, shape index: {}]
  %s4 = inlined_call_operand.vmem [shape: bf16[32,512], index: 4, kind: input, shape index: {}]
  %s5 = inlined_call_operand.vmem [shape: bf16[32,512], index: 5, kind: input, shape index: {}]
  %s6 = inlined_call_operand.vmem [shape: bf16[512,32], index: 6, kind: input, shape index: {}]
  %s7 = inlined_call_operand.hbm [shape: f32[16,32], index: 7, kind: output, shape index: {}]
  %s8 = sld [smem:[#allocation0]]
  $region38: #{tpu_custom_call.1} parent=0
    _
  %s10 = ssub.s32 1, %s8
  %s11 = scalar_select 0, %s10, %s8
  $region1: #{tpu_custom_call.1} parent=0
    #allocation2 [shape = 'u8[8192]{0}', space=vmem, size = 0x2000, scoped, tag = 'output window, operand 0, single buffered']
    #allocation3 [shape = 's32[1]{0}', space=sflag, size = 0x4, scoped, tag = 'scoped memory for tpu_custom_call.1']
    %12 = vsyncpa [#allocation3], 0
    // Predicated region
    $region2: #{tpu_custom_call.1} parent=1 // pred_check
      _
    $region3: #{tpu_custom_call.1} parent=1 // pred_check_branch
      %14 = sbr.rel (0) target = $region5
    $region4: #{tpu_custom_call.1} parent=1 // pred_region
      _
    $region5: #{tpu_custom_call.1} parent=1 // pred_fallthru
      _
    // Predicated region
    $region6: #{tpu_custom_call.1} parent=1 // pred_check
      _
    $region7: #{tpu_custom_call.1} parent=1 // pred_check_branch
      %16 = sbr.rel (0) target = $region9
    $region8: #{tpu_custom_call.1} parent=1 // pred_region
      _
    $region9: #{tpu_custom_call.1} parent=1 // pred_fallthru
      _
    // Predicated region
    $region10: #{tpu_custom_call.1} parent=1 // pred_check
      _
    $region11: #{tpu_custom_call.1} parent=1 // pred_check_branch
      %18 = sbr.rel (0) target = $region13
    $region12: #{tpu_custom_call.1} parent=1 // pred_region
      _
    $region13: #{tpu_custom_call.1} parent=1 // pred_fallthru
      _
    // Predicated region
    $region14: #{tpu_custom_call.1} parent=1 // pred_check
      _
    $region15: #{tpu_custom_call.1} parent=1 // pred_check_branch
      %20 = sbr.rel (0) target = $region17
    $region16: #{tpu_custom_call.1} parent=1 // pred_region
      _
    $region17: #{tpu_custom_call.1} parent=1 // pred_fallthru
      _
    // Predicated region
    $region18: #{tpu_custom_call.1} parent=1 // pred_check
      _
    $region19: #{tpu_custom_call.1} parent=1 // pred_check_branch
      %22 = sbr.rel (0) target = $region21
    $region20: #{tpu_custom_call.1} parent=1 // pred_region
      _
    $region21: #{tpu_custom_call.1} parent=1 // pred_fallthru
      _
    // Predicated region
    $region22: #{tpu_custom_call.1} parent=1 // pred_check
      _
    $region23: #{tpu_custom_call.1} parent=1 // pred_check_branch
      %24 = sbr.rel (0) target = $region25
    $region24: #{tpu_custom_call.1} parent=1 // pred_region
      _
    $region25: #{tpu_custom_call.1} parent=1 // pred_fallthru
      _
    // Predicated region
    $region26: #{tpu_custom_call.1} parent=1 // pred_check
      _
    $region27: #{tpu_custom_call.1} parent=1 // pred_check_branch
      %26 = sbr.rel (0) target = $region29
    $region28: #{tpu_custom_call.1} parent=1 // pred_region
      _
    $region29: #{tpu_custom_call.1} parent=1 // pred_fallthru
      _
    %v28 = vld [vmem:[%s0] sm:$0xf]
    %v29 = vld [vmem:[%s0 + $0x4] sm:$0xf]
    %v30 = vld [vmem:[%s1] sm:$0xf]
    %v31 = vld [vmem:[%s1 + $0x4] sm:$0xf]
    %v32 = vld [vmem:[%s2] sm:$0xf]
    %v33 = vld [vmem:[%s2 + $0x4] sm:$0xf]
    %v34 = vld [vmem:[%s3] sm:$0xff]
    %v35 = vld [vmem:[%s3 + $0x8] sm:$0xff]
    %v36 = vld [vmem:[%s3 + $0x10] sm:$0xff]
    %v37 = vld [vmem:[%s3 + $0x18] sm:$0xff]
    %v40 = vunpack.c.l.b16 %v28
    %v41 = vunpack.c.l.b16 %v29
    %v42 = vpack.c.b16 %v41, %v40
    %v47 = vunpack.c.l.b16 %v34
    %v48 = vunpack.c.h.b16 %v34
    %v49 = vunpack.c.l.b16 %v35
    %v50 = vunpack.c.h.b16 %v35
    %v51 = vunpack.c.l.b16 %v36
    %v52 = vunpack.c.h.b16 %v36
    %v53 = vunpack.c.l.b16 %v37
    %v54 = vunpack.c.h.b16 %v37
    %v55 = vpack.c.b16 %v51, %v47
    %v56 = vpack.c.b16 %v52, %v48
    %v57 = vpack.c.b16 %v53, %v49
    %v58 = vpack.c.b16 %v54, %v50
    %vm63 = vcmask 130048
    %v65 = vsel %vm63, %v42, 0
    %67 = vmatprep.subr.bf16.mxu0 0
    %68 = vmatpush1.bf16.msra.mxu0 0
    %69 = vmatprep.subr.bf16.mxu0 0
    %70 = vmatpush1.bf16.msra.mxu0 0
    %71 = vmatprep.subr.bf16.mxu0 0
    %72 = vmatpush1.bf16.msra.mxu0 0
    %73 = vmatprep.subr.bf16.mxu0 0
    %74 = vmatpush1.bf16.msra.mxu0 0
    %75 = vmatprep.subr.bf16.mxu0 0
    %76 = vmatpush1.bf16.msra.mxu0 0
    %77 = vmatprep.subr.bf16.mxu0 0
    %78 = vmatpush1.bf16.msra.mxu0 0
    %79 = vmatprep.subr.bf16.mxu0 0
    %80 = vmatpush1.bf16.msra.mxu0 0
    %81 = vmatprep.subr.bf16.mxu0 %v56
    %82 = vmatpush1.bf16.msra.mxu0 %v55
    %83 = vmatprep.subr.bf16.mxu0 0
    %84 = vmatpush2.bf16.msra.mxu0 0
    %85 = vmatprep.subr.bf16.mxu0 0
    %86 = vmatpush2.bf16.msra.mxu0 0
    %87 = vmatprep.subr.bf16.mxu0 0
    %88 = vmatpush2.bf16.msra.mxu0 0
    %89 = vmatprep.subr.bf16.mxu0 0
    %90 = vmatpush2.bf16.msra.mxu0 0
    %91 = vmatprep.subr.bf16.mxu0 0
    %92 = vmatpush2.bf16.msra.mxu0 0
    %93 = vmatprep.subr.bf16.mxu0 0
    %94 = vmatpush2.bf16.msra.mxu0 0
    %95 = vmatprep.subr.bf16.mxu0 0
    %96 = vmatpush2.bf16.msra.mxu0 0
    %97 = vmatprep.subr.bf16.mxu0 0
    %98 = vmatpush2.bf16.msra.mxu0 0
    %99 = vmatprep.mubr.bf16.mxu0 0
    %100 = vmatmul.mubr.bf16.gmra.mxu0 %v65
    %v101 = vpop.f32.mrf.mxu0
    %v102 = vadd.f32 0.0, %v101
    %v103 = vpop.f32.mrf.mxu0
    %v104 = vadd.f32 0.0, %v103
    %v105 = vpop.f32.mrf.mxu0
    %v106 = vadd.f32 0.0, %v105
    %v107 = vpop.f32.mrf.mxu0
    %v108 = vadd.f32 0.0, %v107
    %109 = vdwg.mxu0
    %110 = vmatprep.subr.bf16.mxu0 0
    %111 = vmatpush1.bf16.msra.mxu0 0
    %112 = vmatprep.subr.bf16.mxu0 0
    %113 = vmatpush1.bf16.msra.mxu0 0
    %114 = vmatprep.subr.bf16.mxu0 0
    %115 = vmatpush1.bf16.msra.mxu0 0
    %116 = vmatprep.subr.bf16.mxu0 0
    %117 = vmatpush1.bf16.msra.mxu0 0
    %118 = vmatprep.subr.bf16.mxu0 0
    %119 = vmatpush1.bf16.msra.mxu0 0
    %120 = vmatprep.subr.bf16.mxu0 0
    %121 = vmatpush1.bf16.msra.mxu0 0
    %122 = vmatprep.subr.bf16.mxu0 0
    %123 = vmatpush1.bf16.msra.mxu0 0
    %124 = vmatprep.subr.bf16.mxu0 %v58
    %125 = vmatpush1.bf16.msra.mxu0 %v57
    %126 = vmatprep.subr.bf16.mxu0 0
    %127 = vmatpush2.bf16.msra.mxu0 0
    %128 = vmatprep.subr.bf16.mxu0 0
    %129 = vmatpush2.bf16.msra.mxu0 0
    %130 = vmatprep.subr.bf16.mxu0 0
    %131 = vmatpush2.bf16.msra.mxu0 0
    %132 = vmatprep.subr.bf16.mxu0 0
    %133 = vmatpush2.bf16.msra.mxu0 0
    %134 = vmatprep.subr.bf16.mxu0 0
    %135 = vmatpush2.bf16.msra.mxu0 0
    %136 = vmatprep.subr.bf16.mxu0 0
    %137 = vmatpush2.bf16.msra.mxu0 0
    %138 = vmatprep.subr.bf16.mxu0 0
    %139 = vmatpush2.bf16.msra.mxu0 0
    %140 = vmatprep.subr.bf16.mxu0 0
    %141 = vmatpush2.bf16.msra.mxu0 0
    %142 = vmatprep.mubr.bf16.mxu0 0
    %143 = vmatmul.mubr.bf16.gmra.mxu0 %v65
    %v144 = vpop.f32.mrf.mxu0
    %v145 = vadd.f32 0.0, %v144
    %v146 = vpop.f32.mrf.mxu0
    %v147 = vadd.f32 0.0, %v146
    %v148 = vpop.f32.mrf.mxu0
    %v149 = vadd.f32 0.0, %v148
    %v150 = vpop.f32.mrf.mxu0
    %v151 = vadd.f32 0.0, %v150
    %152 = vdwg.mxu0
    %v153 = vld [vmem:[%s4] sm:$0xff]
    %v154 = vld [vmem:[%s4 + $0x8] sm:$0xff]
    %v155 = vld [vmem:[%s4 + $0x10] sm:$0xff]
    %v156 = vld [vmem:[%s4 + $0x18] sm:$0xff]
    %v157 = vld [vmem:[%s4 + $0x20] sm:$0xff]
    %v158 = vld [vmem:[%s4 + $0x28] sm:$0xff]
    %v159 = vld [vmem:[%s4 + $0x30] sm:$0xff]
    %v160 = vld [vmem:[%s4 + $0x38] sm:$0xff]
    %v163 = vunpack.c.l.b16 %v30
    %v164 = vunpack.c.l.b16 %v31
    %v165 = vpack.c.b16 %v164, %v163
    %v174 = vunpack.c.l.b16 %v153
    %v175 = vunpack.c.h.b16 %v153
    %v176 = vunpack.c.l.b16 %v154
    %v177 = vunpack.c.h.b16 %v154
    %v178 = vunpack.c.l.b16 %v155
    %v179 = vunpack.c.h.b16 %v155
    %v180 = vunpack.c.l.b16 %v156
    %v181 = vunpack.c.h.b16 %v156
    %v182 = vunpack.c.l.b16 %v157
    %v183 = vunpack.c.h.b16 %v157
    %v184 = vunpack.c.l.b16 %v158
    %v185 = vunpack.c.h.b16 %v158
    %v186 = vunpack.c.l.b16 %v159
    %v187 = vunpack.c.h.b16 %v159
    %v188 = vunpack.c.l.b16 %v160
    %v189 = vunpack.c.h.b16 %v160
    %v190 = vpack.c.b16 %v178, %v174
    %v191 = vpack.c.b16 %v179, %v175
    %v192 = vpack.c.b16 %v180, %v176
    %v193 = vpack.c.b16 %v181, %v177
    %v194 = vpack.c.b16 %v186, %v182
    %v195 = vpack.c.b16 %v187, %v183
    %v196 = vpack.c.b16 %v188, %v184
    %v197 = vpack.c.b16 %v189, %v185
    %vm206 = vcmask 261120
    %v208 = vsel %vm206, %v165, 0
    %210 = vmatprep.subr.bf16.mxu0 0
    %211 = vmatpush1.bf16.msra.mxu0 0
    %212 = vmatprep.subr.bf16.mxu0 0
    %213 = vmatpush1.bf16.msra.mxu0 0
    %214 = vmatprep.subr.bf16.mxu0 0
    %215 = vmatpush1.bf16.msra.mxu0 0
    %216 = vmatprep.subr.bf16.mxu0 0
    %217 = vmatpush1.bf16.msra.mxu0 0
    %218 = vmatprep.subr.bf16.mxu0 0
    %219 = vmatpush1.bf16.msra.mxu0 0
    %220 = vmatprep.subr.bf16.mxu0 0
    %221 = vmatpush1.bf16.msra.mxu0 0
    %222 = vmatprep.subr.bf16.mxu0 %v195
    %223 = vmatpush1.bf16.msra.mxu0 %v194
    %224 = vmatprep.subr.bf16.mxu0 %v191
    %225 = vmatpush1.bf16.msra.mxu0 %v190
    %226 = vmatprep.subr.bf16.mxu0 0
    %227 = vmatpush2.bf16.msra.mxu0 0
    %228 = vmatprep.subr.bf16.mxu0 0
    %229 = vmatpush2.bf16.msra.mxu0 0
    %230 = vmatprep.subr.bf16.mxu0 0
    %231 = vmatpush2.bf16.msra.mxu0 0
    %232 = vmatprep.subr.bf16.mxu0 0
    %233 = vmatpush2.bf16.msra.mxu0 0
    %234 = vmatprep.subr.bf16.mxu0 0
    %235 = vmatpush2.bf16.msra.mxu0 0
    %236 = vmatprep.subr.bf16.mxu0 0
    %237 = vmatpush2.bf16.msra.mxu0 0
    %238 = vmatprep.subr.bf16.mxu0 0
    %239 = vmatpush2.bf16.msra.mxu0 0
    %240 = vmatprep.subr.bf16.mxu0 0
    %241 = vmatpush2.bf16.msra.mxu0 0
    %242 = vmatprep.mubr.bf16.mxu0 0
    %243 = vmatmul.mubr.bf16.gmra.mxu0 %v208
    %v244 = vpop.f32.mrf.mxu0
    %v245 = vadd.f32 0.0, %v244
    %v246 = vpop.f32.mrf.mxu0
    %v247 = vadd.f32 0.0, %v246
    %v248 = vpop.f32.mrf.mxu0
    %v249 = vadd.f32 0.0, %v248
    %v250 = vpop.f32.mrf.mxu0
    %v251 = vadd.f32 0.0, %v250
    %252 = vdwg.mxu0
    %253 = vmatprep.subr.bf16.mxu0 0
    %254 = vmatpush1.bf16.msra.mxu0 0
    %255 = vmatprep.subr.bf16.mxu0 0
    %256 = vmatpush1.bf16.msra.mxu0 0
    %257 = vmatprep.subr.bf16.mxu0 0
    %258 = vmatpush1.bf16.msra.mxu0 0
    %259 = vmatprep.subr.bf16.mxu0 0
    %260 = vmatpush1.bf16.msra.mxu0 0
    %261 = vmatprep.subr.bf16.mxu0 0
    %262 = vmatpush1.bf16.msra.mxu0 0
    %263 = vmatprep.subr.bf16.mxu0 0
    %264 = vmatpush1.bf16.msra.mxu0 0
    %265 = vmatprep.subr.bf16.mxu0 %v197
    %266 = vmatpush1.bf16.msra.mxu0 %v196
    %267 = vmatprep.subr.bf16.mxu0 %v193
    %268 = vmatpush1.bf16.msra.mxu0 %v192
    %269 = vmatprep.subr.bf16.mxu0 0
    %270 = vmatpush2.bf16.msra.mxu0 0
    %271 = vmatprep.subr.bf16.mxu0 0
    %272 = vmatpush2.bf16.msra.mxu0 0
    %273 = vmatprep.subr.bf16.mxu0 0
    %274 = vmatpush2.bf16.msra.mxu0 0
    %275 = vmatprep.subr.bf16.mxu0 0
    %276 = vmatpush2.bf16.msra.mxu0 0
    %277 = vmatprep.subr.bf16.mxu0 0
    %278 = vmatpush2.bf16.msra.mxu0 0
    %279 = vmatprep.subr.bf16.mxu0 0
    %280 = vmatpush2.bf16.msra.mxu0 0
    %281 = vmatprep.subr.bf16.mxu0 0
    %282 = vmatpush2.bf16.msra.mxu0 0
    %283 = vmatprep.subr.bf16.mxu0 0
    %284 = vmatpush2.bf16.msra.mxu0 0
    %285 = vmatprep.mubr.bf16.mxu0 0
    %286 = vmatmul.mubr.bf16.gmra.mxu0 %v208
    %v287 = vpop.f32.mrf.mxu0
    %v288 = vadd.f32 0.0, %v287
    %v289 = vpop.f32.mrf.mxu0
    %v290 = vadd.f32 0.0, %v289
    %v291 = vpop.f32.mrf.mxu0
    %v292 = vadd.f32 0.0, %v291
    %v293 = vpop.f32.mrf.mxu0
    %v294 = vadd.f32 0.0, %v293
    %295 = vdwg.mxu0
    %v296 = vld [vmem:[%s5] sm:$0xff]
    %v297 = vld [vmem:[%s5 + $0x8] sm:$0xff]
    %v298 = vld [vmem:[%s5 + $0x10] sm:$0xff]
    %v299 = vld [vmem:[%s5 + $0x18] sm:$0xff]
    %v300 = vld [vmem:[%s5 + $0x20] sm:$0xff]
    %v301 = vld [vmem:[%s5 + $0x28] sm:$0xff]
    %v302 = vld [vmem:[%s5 + $0x30] sm:$0xff]
    %v303 = vld [vmem:[%s5 + $0x38] sm:$0xff]
    %v306 = vunpack.c.l.b16 %v32
    %v307 = vunpack.c.l.b16 %v33
    %v308 = vpack.c.b16 %v307, %v306
    %v317 = vunpack.c.l.b16 %v296
    %v318 = vunpack.c.h.b16 %v296
    %v319 = vunpack.c.l.b16 %v297
    %v320 = vunpack.c.h.b16 %v297
    %v321 = vunpack.c.l.b16 %v298
    %v322 = vunpack.c.h.b16 %v298
    %v323 = vunpack.c.l.b16 %v299
    %v324 = vunpack.c.h.b16 %v299
    %v325 = vunpack.c.l.b16 %v300
    %v326 = vunpack.c.h.b16 %v300
    %v327 = vunpack.c.l.b16 %v301
    %v328 = vunpack.c.h.b16 %v301
    %v329 = vunpack.c.l.b16 %v302
    %v330 = vunpack.c.h.b16 %v302
    %v331 = vunpack.c.l.b16 %v303
    %v332 = vunpack.c.h.b16 %v303
    %v333 = vpack.c.b16 %v321, %v317
    %v334 = vpack.c.b16 %v322, %v318
    %v335 = vpack.c.b16 %v323, %v319
    %v336 = vpack.c.b16 %v324, %v320
    %v337 = vpack.c.b16 %v329, %v325
    %v338 = vpack.c.b16 %v330, %v326
    %v339 = vpack.c.b16 %v331, %v327
    %v340 = vpack.c.b16 %v332, %v328
    %v350 = vsel %vm206, %v308, 0
    %352 = vmatprep.subr.bf16.mxu0 0
    %353 = vmatpush1.bf16.msra.mxu0 0
    %354 = vmatprep.subr.bf16.mxu0 0
    %355 = vmatpush1.bf16.msra.mxu0 0
    %356 = vmatprep.subr.bf16.mxu0 0
    %357 = vmatpush1.bf16.msra.mxu0 0
    %358 = vmatprep.subr.bf16.mxu0 0
    %359 = vmatpush1.bf16.msra.mxu0 0
    %360 = vmatprep.subr.bf16.mxu0 0
    %361 = vmatpush1.bf16.msra.mxu0 0
    %362 = vmatprep.subr.bf16.mxu0 0
    %363 = vmatpush1.bf16.msra.mxu0 0
    %364 = vmatprep.subr.bf16.mxu0 %v338
    %365 = vmatpush1.bf16.msra.mxu0 %v337
    %366 = vmatprep.subr.bf16.mxu0 %v334
    %367 = vmatpush1.bf16.msra.mxu0 %v333
    %368 = vmatprep.subr.bf16.mxu0 0
    %369 = vmatpush2.bf16.msra.mxu0 0
    %370 = vmatprep.subr.bf16.mxu0 0
    %371 = vmatpush2.bf16.msra.mxu0 0
    %372 = vmatprep.subr.bf16.mxu0 0
    %373 = vmatpush2.bf16.msra.mxu0 0
    %374 = vmatprep.subr.bf16.mxu0 0
    %375 = vmatpush2.bf16.msra.mxu0 0
    %376 = vmatprep.subr.bf16.mxu0 0
    %377 = vmatpush2.bf16.msra.mxu0 0
    %378 = vmatprep.subr.bf16.mxu0 0
    %379 = vmatpush2.bf16.msra.mxu0 0
    %380 = vmatprep.subr.bf16.mxu0 0
    %381 = vmatpush2.bf16.msra.mxu0 0
    %382 = vmatprep.subr.bf16.mxu0 0
    %383 = vmatpush2.bf16.msra.mxu0 0
    %384 = vmatprep.mubr.bf16.mxu0 0
    %385 = vmatmul.mubr.bf16.gmra.mxu0 %v350
    %v386 = vpop.f32.mrf.mxu0
    %v387 = vadd.f32 0.0, %v386
    %v388 = vpop.f32.mrf.mxu0
    %v389 = vadd.f32 0.0, %v388
    %v390 = vpop.f32.mrf.mxu0
    %v391 = vadd.f32 0.0, %v390
    %v392 = vpop.f32.mrf.mxu0
    %v393 = vadd.f32 0.0, %v392
    %394 = vdwg.mxu0
    %395 = vmatprep.subr.bf16.mxu0 0
    %396 = vmatpush1.bf16.msra.mxu0 0
    %397 = vmatprep.subr.bf16.mxu0 0
    %398 = vmatpush1.bf16.msra.mxu0 0
    %399 = vmatprep.subr.bf16.mxu0 0
    %400 = vmatpush1.bf16.msra.mxu0 0
    %401 = vmatprep.subr.bf16.mxu0 0
    %402 = vmatpush1.bf16.msra.mxu0 0
    %403 = vmatprep.subr.bf16.mxu0 0
    %404 = vmatpush1.bf16.msra.mxu0 0
    %405 = vmatprep.subr.bf16.mxu0 0
    %406 = vmatpush1.bf16.msra.mxu0 0
    %407 = vmatprep.subr.bf16.mxu0 %v340
    %408 = vmatpush1.bf16.msra.mxu0 %v339
    %409 = vmatprep.subr.bf16.mxu0 %v336
    %410 = vmatpush1.bf16.msra.mxu0 %v335
    %411 = vmatprep.subr.bf16.mxu0 0
    %412 = vmatpush2.bf16.msra.mxu0 0
    %413 = vmatprep.subr.bf16.mxu0 0
    %414 = vmatpush2.bf16.msra.mxu0 0
    %415 = vmatprep.subr.bf16.mxu0 0
    %416 = vmatpush2.bf16.msra.mxu0 0
    %417 = vmatprep.subr.bf16.mxu0 0
    %418 = vmatpush2.bf16.msra.mxu0 0
    %419 = vmatprep.subr.bf16.mxu0 0
    %420 = vmatpush2.bf16.msra.mxu0 0
    %421 = vmatprep.subr.bf16.mxu0 0
    %422 = vmatpush2.bf16.msra.mxu0 0
    %423 = vmatprep.subr.bf16.mxu0 0
    %424 = vmatpush2.bf16.msra.mxu0 0
    %425 = vmatprep.subr.bf16.mxu0 0
    %426 = vmatpush2.bf16.msra.mxu0 0
    %427 = vmatprep.mubr.bf16.mxu0 0
    %428 = vmatmul.mubr.bf16.gmra.mxu0 %v350
    %v429 = vpop.f32.mrf.mxu0
    %v430 = vadd.f32 0.0, %v429
    %v431 = vpop.f32.mrf.mxu0
    %v432 = vadd.f32 0.0, %v431
    %v433 = vpop.f32.mrf.mxu0
    %v434 = vadd.f32 0.0, %v433
    %v435 = vpop.f32.mrf.mxu0
    %v436 = vadd.f32 0.0, %v435
    %437 = vdwg.mxu0
    %v438 = vmul.f32 %v102, %v245
    %v439 = vmul.f32 %v104, %v247
    %v440 = vmul.f32 %v145, %v288
    %v441 = vmul.f32 %v147, %v290
    %v442 = vmul.f32 %v106, %v249
    %v443 = vmul.f32 %v108, %v251
    %v444 = vmul.f32 %v149, %v292
    %v445 = vmul.f32 %v151, %v294
    %v446 = vmul.f32 %v438, %v387
    %v447 = vmul.f32 %v439, %v389
    %v448 = vmul.f32 %v440, %v430
    %v449 = vmul.f32 %v441, %v432
    %v450 = vmul.f32 %v442, %v391
    %v451 = vmul.f32 %v443, %v393
    %v452 = vmul.f32 %v444, %v434
    %v453 = vmul.f32 %v445, %v436
    %v454 = vpack.c.bf16 %v450, %v446
    %v455 = vpack.c.bf16 %v451, %v447
    %v456 = vpack.c.bf16 %v452, %v448
    %v457 = vpack.c.bf16 %v453, %v449
    %v458 = vld [vmem:[%s6] sm:$0xf]
    %v459 = vld [vmem:[%s6 + $0x4] sm:$0xf]
    %v460 = vld [vmem:[%s6 + $0x8] sm:$0xf]
    %v461 = vld [vmem:[%s6 + $0xc] sm:$0xf]
    %v462 = vld [vmem:[%s6 + $0x10] sm:$0xf]
    %v463 = vld [vmem:[%s6 + $0x14] sm:$0xf]
    %v464 = vld [vmem:[%s6 + $0x18] sm:$0xf]
    %v465 = vld [vmem:[%s6 + $0x1c] sm:$0xf]
    %v466 = vld [vmem:[%s6 + $0x20] sm:$0xf]
    %v467 = vld [vmem:[%s6 + $0x24] sm:$0xf]
    %v468 = vld [vmem:[%s6 + $0x28] sm:$0xf]
    %v469 = vld [vmem:[%s6 + $0x2c] sm:$0xf]
    %v470 = vld [vmem:[%s6 + $0x30] sm:$0xf]
    %v471 = vld [vmem:[%s6 + $0x34] sm:$0xf]
    %v472 = vld [vmem:[%s6 + $0x38] sm:$0xf]
    %v473 = vld [vmem:[%s6 + $0x3c] sm:$0xf]
    %v474 = vld [vmem:[%s6 + $0x40] sm:$0xf]
    %v475 = vld [vmem:[%s6 + $0x44] sm:$0xf]
    %v476 = vld [vmem:[%s6 + $0x48] sm:$0xf]
    %v477 = vld [vmem:[%s6 + $0x4c] sm:$0xf]
    %v478 = vld [vmem:[%s6 + $0x50] sm:$0xf]
    %v479 = vld [vmem:[%s6 + $0x54] sm:$0xf]
    %v480 = vld [vmem:[%s6 + $0x58] sm:$0xf]
    %v481 = vld [vmem:[%s6 + $0x5c] sm:$0xf]
    %v482 = vld [vmem:[%s6 + $0x60] sm:$0xf]
    %v483 = vld [vmem:[%s6 + $0x64] sm:$0xf]
    %v484 = vld [vmem:[%s6 + $0x68] sm:$0xf]
    %v485 = vld [vmem:[%s6 + $0x6c] sm:$0xf]
    %v486 = vld [vmem:[%s6 + $0x70] sm:$0xf]
    %v487 = vld [vmem:[%s6 + $0x74] sm:$0xf]
    %v488 = vld [vmem:[%s6 + $0x78] sm:$0xf]
    %v489 = vld [vmem:[%s6 + $0x7c] sm:$0xf]
    %v490 = vld [vmem:[%s6 + $0x80] sm:$0xf]
    %v491 = vld [vmem:[%s6 + $0x84] sm:$0xf]
    %v492 = vld [vmem:[%s6 + $0x88] sm:$0xf]
    %v493 = vld [vmem:[%s6 + $0x8c] sm:$0xf]
    %v494 = vld [vmem:[%s6 + $0x90] sm:$0xf]
    %v495 = vld [vmem:[%s6 + $0x94] sm:$0xf]
    %v496 = vld [vmem:[%s6 + $0x98] sm:$0xf]
    %v497 = vld [vmem:[%s6 + $0x9c] sm:$0xf]
    %v498 = vld [vmem:[%s6 + $0xa0] sm:$0xf]
    %v499 = vld [vmem:[%s6 + $0xa4] sm:$0xf]
    %v500 = vld [vmem:[%s6 + $0xa8] sm:$0xf]
    %v501 = vld [vmem:[%s6 + $0xac] sm:$0xf]
    %v502 = vld [vmem:[%s6 + $0xb0] sm:$0xf]
    %v503 = vld [vmem:[%s6 + $0xb4] sm:$0xf]
    %v504 = vld [vmem:[%s6 + $0xb8] sm:$0xf]
    %v505 = vld [vmem:[%s6 + $0xbc] sm:$0xf]
    %v506 = vld [vmem:[%s6 + $0xc0] sm:$0xf]
    %v507 = vld [vmem:[%s6 + $0xc4] sm:$0xf]
    %v508 = vld [vmem:[%s6 + $0xc8] sm:$0xf]
    %v509 = vld [vmem:[%s6 + $0xcc] sm:$0xf]
    %v510 = vld [vmem:[%s6 + $0xd0] sm:$0xf]
    %v511 = vld [vmem:[%s6 + $0xd4] sm:$0xf]
    %v512 = vld [vmem:[%s6 + $0xd8] sm:$0xf]
    %v513 = vld [vmem:[%s6 + $0xdc] sm:$0xf]
    %v514 = vld [vmem:[%s6 + $0xe0] sm:$0xf]
    %v515 = vld [vmem:[%s6 + $0xe4] sm:$0xf]
    %v516 = vld [vmem:[%s6 + $0xe8] sm:$0xf]
    %v517 = vld [vmem:[%s6 + $0xec] sm:$0xf]
    %v518 = vld [vmem:[%s6 + $0xf0] sm:$0xf]
    %v519 = vld [vmem:[%s6 + $0xf4] sm:$0xf]
    %v520 = vld [vmem:[%s6 + $0xf8] sm:$0xf]
    %v521 = vld [vmem:[%s6 + $0xfc] sm:$0xf]
    %v586 = vunpack.c.l.b16 %v458
    %v587 = vunpack.c.l.b16 %v459
    %v588 = vunpack.c.l.b16 %v460
    %v589 = vunpack.c.l.b16 %v461
    %v590 = vunpack.c.l.b16 %v462
    %v591 = vunpack.c.l.b16 %v463
    %v592 = vunpack.c.l.b16 %v464
    %v593 = vunpack.c.l.b16 %v465
    %v594 = vunpack.c.l.b16 %v466
    %v595 = vunpack.c.l.b16 %v467
    %v596 = vunpack.c.l.b16 %v468
    %v597 = vunpack.c.l.b16 %v469
    %v598 = vunpack.c.l.b16 %v470
    %v599 = vunpack.c.l.b16 %v471
    %v600 = vunpack.c.l.b16 %v472
    %v601 = vunpack.c.l.b16 %v473
    %v602 = vunpack.c.l.b16 %v474
    %v603 = vunpack.c.l.b16 %v475
    %v604 = vunpack.c.l.b16 %v476
    %v605 = vunpack.c.l.b16 %v477
    %v606 = vunpack.c.l.b16 %v478
    %v607 = vunpack.c.l.b16 %v479
    %v608 = vunpack.c.l.b16 %v480
    %v609 = vunpack.c.l.b16 %v481
    %v610 = vunpack.c.l.b16 %v482
    %v611 = vunpack.c.l.b16 %v483
    %v612 = vunpack.c.l.b16 %v484
    %v613 = vunpack.c.l.b16 %v485
    %v614 = vunpack.c.l.b16 %v486
    %v615 = vunpack.c.l.b16 %v487
    %v616 = vunpack.c.l.b16 %v488
    %v617 = vunpack.c.l.b16 %v489
    %v618 = vunpack.c.l.b16 %v490
    %v619 = vunpack.c.l.b16 %v491
    %v620 = vunpack.c.l.b16 %v492
    %v621 = vunpack.c.l.b16 %v493
    %v622 = vunpack.c.l.b16 %v494
    %v623 = vunpack.c.l.b16 %v495
    %v624 = vunpack.c.l.b16 %v496
    %v625 = vunpack.c.l.b16 %v497
    %v626 = vunpack.c.l.b16 %v498
    %v627 = vunpack.c.l.b16 %v499
    %v628 = vunpack.c.l.b16 %v500
    %v629 = vunpack.c.l.b16 %v501
    %v630 = vunpack.c.l.b16 %v502
    %v631 = vunpack.c.l.b16 %v503
    %v632 = vunpack.c.l.b16 %v504
    %v633 = vunpack.c.l.b16 %v505
    %v634 = vunpack.c.l.b16 %v506
    %v635 = vunpack.c.l.b16 %v507
    %v636 = vunpack.c.l.b16 %v508
    %v637 = vunpack.c.l.b16 %v509
    %v638 = vunpack.c.l.b16 %v510
    %v639 = vunpack.c.l.b16 %v511
    %v640 = vunpack.c.l.b16 %v512
    %v641 = vunpack.c.l.b16 %v513
    %v642 = vunpack.c.l.b16 %v514
    %v643 = vunpack.c.l.b16 %v515
    %v644 = vunpack.c.l.b16 %v516
    %v645 = vunpack.c.l.b16 %v517
    %v646 = vunpack.c.l.b16 %v518
    %v647 = vunpack.c.l.b16 %v519
    %v648 = vunpack.c.l.b16 %v520
    %v649 = vunpack.c.l.b16 %v521
    %v650 = vpack.c.b16 %v587, %v586
    %v651 = vpack.c.b16 %v589, %v588
    %v652 = vpack.c.b16 %v591, %v590
    %v653 = vpack.c.b16 %v593, %v592
    %v654 = vpack.c.b16 %v595, %v594
    %v655 = vpack.c.b16 %v597, %v596
    %v656 = vpack.c.b16 %v599, %v598
    %v657 = vpack.c.b16 %v601, %v600
    %v658 = vpack.c.b16 %v603, %v602
    %v659 = vpack.c.b16 %v605, %v604
    %v660 = vpack.c.b16 %v607, %v606
    %v661 = vpack.c.b16 %v609, %v608
    %v662 = vpack.c.b16 %v611, %v610
    %v663 = vpack.c.b16 %v613, %v612
    %v664 = vpack.c.b16 %v615, %v614
    %v665 = vpack.c.b16 %v617, %v616
    %v666 = vpack.c.b16 %v619, %v618
    %v667 = vpack.c.b16 %v621, %v620
    %v668 = vpack.c.b16 %v623, %v622
    %v669 = vpack.c.b16 %v625, %v624
    %v670 = vpack.c.b16 %v627, %v626
    %v671 = vpack.c.b16 %v629, %v628
    %v672 = vpack.c.b16 %v631, %v630
    %v673 = vpack.c.b16 %v633, %v632
    %v674 = vpack.c.b16 %v635, %v634
    %v675 = vpack.c.b16 %v637, %v636
    %v676 = vpack.c.b16 %v639, %v638
    %v677 = vpack.c.b16 %v641, %v640
    %v678 = vpack.c.b16 %v643, %v642
    %v679 = vpack.c.b16 %v645, %v644
    %v680 = vpack.c.b16 %v647, %v646
    %v681 = vpack.c.b16 %v649, %v648
    %714 = vmatprep.subr.bf16.mxu0 0
    %715 = vmatpush1.bf16.msra.mxu0 %v657
    %716 = vmatprep.subr.bf16.mxu0 0
    %717 = vmatpush1.bf16.msra.mxu0 %v656
    %718 = vmatprep.subr.bf16.mxu0 0
    %719 = vmatpush1.bf16.msra.mxu0 %v655
    %720 = vmatprep.subr.bf16.mxu0 0
    %721 = vmatpush1.bf16.msra.mxu0 %v654
    %722 = vmatprep.subr.bf16.mxu0 0
    %723 = vmatpush1.bf16.msra.mxu0 %v653
    %724 = vmatprep.subr.bf16.mxu0 0
    %725 = vmatpush1.bf16.msra.mxu0 %v652
    %726 = vmatprep.subr.bf16.mxu0 0
    %727 = vmatpush1.bf16.msra.mxu0 %v651
    %728 = vmatprep.subr.bf16.mxu0 0
    %729 = vmatpush1.bf16.msra.mxu0 %v650
    %730 = vmatprep.subr.bf16.mxu0 0
    %731 = vmatpush2.bf16.msra.mxu0 %v665
    %732 = vmatprep.subr.bf16.mxu0 0
    %733 = vmatpush2.bf16.msra.mxu0 %v664
    %734 = vmatprep.subr.bf16.mxu0 0
    %735 = vmatpush2.bf16.msra.mxu0 %v663
    %736 = vmatprep.subr.bf16.mxu0 0
    %737 = vmatpush2.bf16.msra.mxu0 %v662
    %738 = vmatprep.subr.bf16.mxu0 0
    %739 = vmatpush2.bf16.msra.mxu0 %v661
    %740 = vmatprep.subr.bf16.mxu0 0
    %741 = vmatpush2.bf16.msra.mxu0 %v660
    %742 = vmatprep.subr.bf16.mxu0 0
    %743 = vmatpush2.bf16.msra.mxu0 %v659
    %744 = vmatprep.subr.bf16.mxu0 0
    %745 = vmatpush2.bf16.msra.mxu0 %v658
    %746 = vmatprep.mubr.bf16.mxu0 %v455
    %747 = vmatmul.mubr.bf16.gmra.mxu0 %v454
    %v748 = vpop.f32.mrf.mxu0
    %v749 = vadd.f32 0.0, %v748
    %v750 = vpop.f32.mrf.mxu0
    %v751 = vpop.f32.mrf.mxu0
    %v752 = vadd.f32 0.0, %v751
    %v753 = vpop.f32.mrf.mxu0
    %754 = vdwg.mxu0
    %755 = vmatprep.subr.bf16.mxu0 0
    %756 = vmatpush1.bf16.msra.mxu0 %v673
    %757 = vmatprep.subr.bf16.mxu0 0
    %758 = vmatpush1.bf16.msra.mxu0 %v672
    %759 = vmatprep.subr.bf16.mxu0 0
    %760 = vmatpush1.bf16.msra.mxu0 %v671
    %761 = vmatprep.subr.bf16.mxu0 0
    %762 = vmatpush1.bf16.msra.mxu0 %v670
    %763 = vmatprep.subr.bf16.mxu0 0
    %764 = vmatpush1.bf16.msra.mxu0 %v669
    %765 = vmatprep.subr.bf16.mxu0 0
    %766 = vmatpush1.bf16.msra.mxu0 %v668
    %767 = vmatprep.subr.bf16.mxu0 0
    %768 = vmatpush1.bf16.msra.mxu0 %v667
    %769 = vmatprep.subr.bf16.mxu0 0
    %770 = vmatpush1.bf16.msra.mxu0 %v666
    %771 = vmatprep.subr.bf16.mxu0 0
    %772 = vmatpush2.bf16.msra.mxu0 %v681
    %773 = vmatprep.subr.bf16.mxu0 0
    %774 = vmatpush2.bf16.msra.mxu0 %v680
    %775 = vmatprep.subr.bf16.mxu0 0
    %776 = vmatpush2.bf16.msra.mxu0 %v679
    %777 = vmatprep.subr.bf16.mxu0 0
    %778 = vmatpush2.bf16.msra.mxu0 %v678
    %779 = vmatprep.subr.bf16.mxu0 0
    %780 = vmatpush2.bf16.msra.mxu0 %v677
    %781 = vmatprep.subr.bf16.mxu0 0
    %782 = vmatpush2.bf16.msra.mxu0 %v676
    %783 = vmatprep.subr.bf16.mxu0 0
    %784 = vmatpush2.bf16.msra.mxu0 %v675
    %785 = vmatprep.subr.bf16.mxu0 0
    %786 = vmatpush2.bf16.msra.mxu0 %v674
    %787 = vmatprep.mubr.bf16.mxu0 %v457
    %788 = vmatmul.mubr.bf16.gmra.mxu0 %v456
    %v789 = vpop.f32.mrf.mxu0
    %v790 = vadd.f32 %v749, %v789
    %v791 = vpop.f32.mrf.mxu0
    %v792 = vpop.f32.mrf.mxu0
    %v793 = vadd.f32 %v752, %v792
    %v794 = vpop.f32.mrf.mxu0
    %795 = vdwg.mxu0
    %796 = vst.msk [vmem:[#allocation2] sm:$0xff] %vm206, %v790
    %797 = vst.msk [vmem:[#allocation2 + $0x8] sm:$0xff] %vm206, %v793
    // Predicated region
    $region30: #{tpu_custom_call.1} parent=1 // pred_check
      _
    $region31: #{tpu_custom_call.1} parent=1 // pred_check_branch
      %799 = sbr.rel (0) target = $region33
    $region32: #{tpu_custom_call.1} parent=1 // pred_region
      %s801 = ssub.s32 256, 256
      %802 = vsyncadd [#allocation3], %s801
      %s803 = sshll.u32 [#allocation2], 4
      %s804 = int_to_ptr.vmem [resolvable:$true] %s803
      %809 = dma.vmem_to_hbm [thread:$0]  %s804, 256, %s7, [#allocation3], 128, 128, 8
    $region33: #{tpu_custom_call.1} parent=1 // pred_fallthru
      _
    // Predicated region
    $region34: #{tpu_custom_call.1} parent=1 // pred_check
      _
    $region35: #{tpu_custom_call.1} parent=1 // pred_check_branch
      %811 = sbr.rel (0) target = $region37
    $region36: #{tpu_custom_call.1} parent=1 // pred_region
      %812 = dma.done [#allocation3], 256
    $region37: #{tpu_custom_call.1} parent=1 // pred_fallthru
      _
    %813 = vsyncpa [#allocation3], 1

</llo_original>
